<compile_context>
chip_gen: v6e
topology: v6e:2x2x1
jax: 0.10.0
libtpu: 0.0.40
codegen_flags: <defaults>
</compile_context>

<pallas_src>
import jax
import jax.numpy as jnp
from jax.experimental import pallas as pl
from jax.experimental.pallas import tpu as pltpu


def _lstm2_kernel(x_ref, wih_ref, whh_ref, b_ref, wlin_ref, blin_ref, out_ref):
    """Full LSTM recurrence + final linear in a single kernel invocation.

    x_ref:    (seq_len, input_size)
    wih_ref:  (input_size, 4H)   g-gate columns pre-scaled by 2
    whh_ref:  (H, 4H)            g-gate columns pre-scaled by 2
    b_ref:    (1, 4H)            b_ih + b_hh, g-gate slice pre-scaled by 2
    wlin_ref: (H, output_size)
    blin_ref: (1, output_size)
    out_ref:  (1, output_size)
    """
    seq_len = x_ref.shape[0]          # static
    H = whh_ref.shape[0]

    # (1) Hoist the input projection + bias out of the recurrence:
    #     one M=seq_len matmul instead of seq_len M=1 matmuls on the serial path.
    xw = (jnp.dot(x_ref[...], wih_ref[...],
                  preferred_element_type=jnp.float32)
          + b_ref[...])               # (seq_len, 4H)

    # (2) Carry h / c in vregs — no VMEM scratch round trips.
    h = jnp.zeros((1, H), jnp.float32)
    c = jnp.zeros((1, H), jnp.float32)

    # (3) Fully unrolled recurrence (seq_len is a small static constant).
    for t in range(seq_len):
        gates = xw[t:t + 1, :] + jnp.dot(h, whh_ref[...],
                                         preferred_element_type=jnp.float32)
        # (4) One EUP pass over the full (1, 4H) vreg.  Because the g-gate
        #     pre-activations were scaled by 2 at pack time:
        #     2*sigmoid(2z) - 1 == tanh(z).
        s = jax.nn.sigmoid(gates)
        i_g = s[:, 0 * H:1 * H]
        f_g = s[:, 1 * H:2 * H]
        g_g = 2.0 * s[:, 2 * H:3 * H] - 1.0
        o_g = s[:, 3 * H:4 * H]
        c = f_g * c + i_g * g_g
        h = o_g * jnp.tanh(c)

    # predictions[-1] == Linear(h_{T-1})
    out_ref[...] = (jnp.dot(h, wlin_ref[...],
                            preferred_element_type=jnp.float32)
                    + blin_ref[...])


def lstm2_forward(input_seq, kernel_params):
    """input_seq: (seq_len, input_size) f32 -> (output_size,) f32."""
    w_ih_t = kernel_params["w_ih_t"]      # (input_size, 4H)  (g cols x2)
    w_hh_t = kernel_params["w_hh_t"]      # (H, 4H)           (g cols x2)
    bias = kernel_params["bias"]          # (1, 4H)           (g slice x2)
    w_lin_t = kernel_params["w_lin_t"]    # (H, output_size)
    b_lin = kernel_params["b_lin"]        # (1, output_size)

    output_size = w_lin_t.shape[1]

    out = pl.pallas_call(
        _lstm2_kernel,
        out_shape=jax.ShapeDtypeStruct((1, output_size), jnp.float32),
        in_specs=[
            pl.BlockSpec(memory_space=pltpu.VMEM),   # x
            pl.BlockSpec(memory_space=pltpu.VMEM),   # W_ih^T
            pl.BlockSpec(memory_space=pltpu.VMEM),   # W_hh^T
            pl.BlockSpec(memory_space=pltpu.VMEM),   # bias
            pl.BlockSpec(memory_space=pltpu.VMEM),   # W_lin^T
            pl.BlockSpec(memory_space=pltpu.VMEM),   # b_lin
        ],
        out_specs=pl.BlockSpec(memory_space=pltpu.VMEM),
    )(input_seq, w_ih_t, w_hh_t, bias, w_lin_t, b_lin)
    return out[0]   # (output_size,)  == predictions[-1]


def init_params(key, input_size, hidden_layer_size, output_size):
    """Deterministic synthetic parameters (shapes as in nn.LSTM / nn.Linear),
    returned in transposed, UNscaled form (as the pure-JAX reference uses)."""
    H = hidden_layer_size // 2
    k = 1.0 / jnp.sqrt(H)
    keys = jax.random.split(key, 6)
    # PyTorch nn.LSTM param shapes: weight_ih (4H, input), weight_hh (4H, H)
    w_ih = jax.random.uniform(keys[0], (4 * H, input_size), jnp.float32, -k, k)
    w_hh = jax.random.uniform(keys[1], (4 * H, H), jnp.float32, -k, k)
    b_ih = jax.random.uniform(keys[2], (4 * H,), jnp.float32, -k, k)
    b_hh = jax.random.uniform(keys[3], (4 * H,), jnp.float32, -k, k)
    # nn.Linear(H, output_size): weight (output_size, H), bias (output_size,)
    w_lin = jax.random.uniform(keys[4], (output_size, H), jnp.float32, -k, k)
    b_lin = jax.random.uniform(keys[5], (output_size,), jnp.float32, -k, k)
    return {
        "w_ih_t": w_ih.T,                                  # (input_size, 4H)
        "w_hh_t": w_hh.T,                                  # (H, 4H)
        "bias": (b_ih + b_hh).reshape(1, 4 * H),           # (1, 4H)
        "w_lin_t": w_lin.T,                                # (H, output_size)
        "b_lin": b_lin.reshape(1, output_size),            # (1, output_size)
    }


def pack_params_for_kernel(params):
    """Pre-scale the g-gate (3rd) block of W_ih/W_hh/bias by 2 so the kernel
    can apply a single sigmoid to all four gates (tanh(z) = 2*sigmoid(2z)-1)."""
    H = params["w_hh_t"].shape[0]
    scale = jnp.concatenate([
        jnp.ones((H,), jnp.float32),
        jnp.ones((H,), jnp.float32),
        jnp.full((H,), 2.0, jnp.float32),
        jnp.ones((H,), jnp.float32),
    ])                                                     # (4H,)
    return {
        "w_ih_t": params["w_ih_t"] * scale[None, :],
        "w_hh_t": params["w_hh_t"] * scale[None, :],
        "bias": params["bias"] * scale[None, :],
        "w_lin_t": params["w_lin_t"],
        "b_lin": params["b_lin"],
    }


def _reference_forward(input_seq, params):
    """Pure-JAX reference of the same LSTM recurrence (standard gate math)."""
    H = params["w_hh_t"].shape[0]
    h = jnp.zeros((1, H), jnp.float32)
    c = jnp.zeros((1, H), jnp.float32)
    for t in range(input_seq.shape[0]):
        x_t = input_seq[t:t + 1]
        gates = x_t @ params["w_ih_t"] + h @ params["w_hh_t"] + params["bias"]
        i = jax.nn.sigmoid(gates[:, 0 * H:1 * H])
        f = jax.nn.sigmoid(gates[:, 1 * H:2 * H])
        g = jnp.tanh(gates[:, 2 * H:3 * H])
        o = jax.nn.sigmoid(gates[:, 3 * H:4 * H])
        c = f * c + i * g
        h = o * jnp.tanh(c)
    return (h @ params["w_lin_t"] + params["b_lin"])[0]


if __name__ == "__main__":
    # args: input_size=4, hidden_layer_size=64 (-> LSTM hidden H=32), output_size=4
    seq_len, input_size, hidden_layer_size, output_size = 8, 4, 64, 4

    key = jax.random.PRNGKey(0)
    k_x, k_p = jax.random.split(key)
    input_seq = jax.random.normal(k_x, (seq_len, input_size), jnp.float32)
    params = init_params(k_p, input_size, hidden_layer_size, output_size)
    kernel_params = pack_params_for_kernel(params)

    out = lstm2_forward(input_seq, kernel_params)
    out = jax.block_until_ready(out)

    ref = _reference_forward(input_seq, params)
    assert out.shape == (output_size,)
    assert jnp.allclose(out, ref, atol=1e-5, rtol=1e-5), (out, ref)

    print("KERNEL_OK")
</pallas_src>

<mosaic_0001>
module attributes {stable_mosaic.version = 11 : i64} {
  func.func @_lstm2_kernel(%arg0: memref<8x4xf32, #tpu.memory_space<vmem>>, %arg1: memref<4x128xf32, #tpu.memory_space<vmem>>, %arg2: memref<32x128xf32, #tpu.memory_space<vmem>>, %arg3: memref<1x128xf32, #tpu.memory_space<vmem>>, %arg4: memref<32x4xf32, #tpu.memory_space<vmem>>, %arg5: memref<1x4xf32, #tpu.memory_space<vmem>>, %arg6: memref<1x4xf32, #tpu.memory_space<vmem>>) attributes {dimension_semantics = [], scalar_prefetch = 0 : i64, scratch_operands = 0 : i64, tpu.core_type = #tpu.core_type<tc>} {
    %c0 = arith.constant 0 : index
    %c0_0 = arith.constant 0 : index
    %0 = vector.load %arg0[%c0, %c0_0] : memref<8x4xf32, #tpu.memory_space<vmem>>, vector<8x4xf32>
    %c0_1 = arith.constant 0 : index
    %c0_2 = arith.constant 0 : index
    %1 = vector.load %arg1[%c0_1, %c0_2] : memref<4x128xf32, #tpu.memory_space<vmem>>, vector<4x128xf32>
    %cst = arith.constant dense<0.000000e+00> : vector<8x128xf32>
    %2 = tpu.matmul %0, %1, %cst {dimension_numbers = #tpu.dot_dimension_numbers<[1], [0], [0], [1], [0, 0, 1, 1], [], []>} : vector<8x4xf32>, vector<4x128xf32>, vector<8x128xf32> -> vector<8x128xf32>
    %c0_3 = arith.constant 0 : index
    %c0_4 = arith.constant 0 : index
    %3 = vector.load %arg3[%c0_3, %c0_4] : memref<1x128xf32, #tpu.memory_space<vmem>>, vector<1x128xf32>
    %4 = vector.broadcast %3 : vector<1x128xf32> to vector<8x128xf32>
    %5 = arith.addf %2, %4 : vector<8x128xf32>
    %cst_5 = arith.constant 0.000000e+00 : f32
    %6 = vector.broadcast %cst_5 : f32 to vector<1x32xf32>
    %cst_6 = arith.constant 0.000000e+00 : f32
    %7 = vector.broadcast %cst_6 : f32 to vector<1x32xf32>
    %8 = vector.extract_strided_slice %5 {offsets = [0, 0], sizes = [1, 128], strides = [1, 1]} : vector<8x128xf32> to vector<1x128xf32>
    %c0_7 = arith.constant 0 : index
    %c0_8 = arith.constant 0 : index
    %9 = vector.load %arg2[%c0_7, %c0_8] : memref<32x128xf32, #tpu.memory_space<vmem>>, vector<32x128xf32>
    %cst_9 = arith.constant dense<0.000000e+00> : vector<1x128xf32>
    %10 = tpu.matmul %6, %9, %cst_9 {dimension_numbers = #tpu.dot_dimension_numbers<[1], [0], [0], [1], [0, 0, 1, 1], [], []>} : vector<1x32xf32>, vector<32x128xf32>, vector<1x128xf32> -> vector<1x128xf32>
    %11 = arith.addf %8, %10 : vector<1x128xf32>
    %12 = arith.negf %11 : vector<1x128xf32>
    %13 = math.exp %12 : vector<1x128xf32>
    %cst_10 = arith.constant 1.000000e+00 : f32
    %14 = vector.broadcast %cst_10 : f32 to vector<1x128xf32>
    %15 = arith.addf %14, %13 : vector<1x128xf32>
    %16 = arith.divf %14, %15 : vector<1x128xf32>
    %17 = vector.extract_strided_slice %16 {offsets = [0, 0], sizes = [1, 32], strides = [1, 1]} : vector<1x128xf32> to vector<1x32xf32>
    %18 = vector.extract_strided_slice %16 {offsets = [0, 32], sizes = [1, 32], strides = [1, 1]} : vector<1x128xf32> to vector<1x32xf32>
    %19 = vector.extract_strided_slice %16 {offsets = [0, 64], sizes = [1, 32], strides = [1, 1]} : vector<1x128xf32> to vector<1x32xf32>
    %cst_11 = arith.constant 2.000000e+00 : f32
    %20 = vector.broadcast %cst_11 : f32 to vector<1x32xf32>
    %21 = arith.mulf %20, %19 : vector<1x32xf32>
    %cst_12 = arith.constant 1.000000e+00 : f32
    %22 = vector.broadcast %cst_12 : f32 to vector<1x32xf32>
    %23 = arith.subf %21, %22 : vector<1x32xf32>
    %24 = vector.extract_strided_slice %16 {offsets = [0, 96], sizes = [1, 32], strides = [1, 1]} : vector<1x128xf32> to vector<1x32xf32>
    %25 = arith.mulf %18, %7 : vector<1x32xf32>
    %26 = arith.mulf %17, %23 : vector<1x32xf32>
    %27 = arith.addf %25, %26 : vector<1x32xf32>
    %28 = math.tanh %27 : vector<1x32xf32>
    %29 = arith.mulf %24, %28 : vector<1x32xf32>
    %30 = vector.extract_strided_slice %5 {offsets = [1, 0], sizes = [1, 128], strides = [1, 1]} : vector<8x128xf32> to vector<1x128xf32>
    %c0_13 = arith.constant 0 : index
    %c0_14 = arith.constant 0 : index
    %31 = vector.load %arg2[%c0_13, %c0_14] : memref<32x128xf32, #tpu.memory_space<vmem>>, vector<32x128xf32>
    %cst_15 = arith.constant dense<0.000000e+00> : vector<1x128xf32>
    %32 = tpu.matmul %29, %31, %cst_15 {dimension_numbers = #tpu.dot_dimension_numbers<[1], [0], [0], [1], [0, 0, 1, 1], [], []>} : vector<1x32xf32>, vector<32x128xf32>, vector<1x128xf32> -> vector<1x128xf32>
    %33 = arith.addf %30, %32 : vector<1x128xf32>
    %34 = arith.negf %33 : vector<1x128xf32>
    %35 = math.exp %34 : vector<1x128xf32>
    %cst_16 = arith.constant 1.000000e+00 : f32
    %36 = vector.broadcast %cst_16 : f32 to vector<1x128xf32>
    %37 = arith.addf %36, %35 : vector<1x128xf32>
    %38 = arith.divf %36, %37 : vector<1x128xf32>
    %39 = vector.extract_strided_slice %38 {offsets = [0, 0], sizes = [1, 32], strides = [1, 1]} : vector<1x128xf32> to vector<1x32xf32>
    %40 = vector.extract_strided_slice %38 {offsets = [0, 32], sizes = [1, 32], strides = [1, 1]} : vector<1x128xf32> to vector<1x32xf32>
    %41 = vector.extract_strided_slice %38 {offsets = [0, 64], sizes = [1, 32], strides = [1, 1]} : vector<1x128xf32> to vector<1x32xf32>
    %cst_17 = arith.constant 2.000000e+00 : f32
    %42 = vector.broadcast %cst_17 : f32 to vector<1x32xf32>
    %43 = arith.mulf %42, %41 : vector<1x32xf32>
    %cst_18 = arith.constant 1.000000e+00 : f32
    %44 = vector.broadcast %cst_18 : f32 to vector<1x32xf32>
    %45 = arith.subf %43, %44 : vector<1x32xf32>
    %46 = vector.extract_strided_slice %38 {offsets = [0, 96], sizes = [1, 32], strides = [1, 1]} : vector<1x128xf32> to vector<1x32xf32>
    %47 = arith.mulf %40, %27 : vector<1x32xf32>
    %48 = arith.mulf %39, %45 : vector<1x32xf32>
    %49 = arith.addf %47, %48 : vector<1x32xf32>
    %50 = math.tanh %49 : vector<1x32xf32>
    %51 = arith.mulf %46, %50 : vector<1x32xf32>
    %52 = vector.extract_strided_slice %5 {offsets = [2, 0], sizes = [1, 128], strides = [1, 1]} : vector<8x128xf32> to vector<1x128xf32>
    %c0_19 = arith.constant 0 : index
    %c0_20 = arith.constant 0 : index
    %53 = vector.load %arg2[%c0_19, %c0_20] : memref<32x128xf32, #tpu.memory_space<vmem>>, vector<32x128xf32>
    %cst_21 = arith.constant dense<0.000000e+00> : vector<1x128xf32>
    %54 = tpu.matmul %51, %53, %cst_21 {dimension_numbers = #tpu.dot_dimension_numbers<[1], [0], [0], [1], [0, 0, 1, 1], [], []>} : vector<1x32xf32>, vector<32x128xf32>, vector<1x128xf32> -> vector<1x128xf32>
    %55 = arith.addf %52, %54 : vector<1x128xf32>
    %56 = arith.negf %55 : vector<1x128xf32>
    %57 = math.exp %56 : vector<1x128xf32>
    %cst_22 = arith.constant 1.000000e+00 : f32
    %58 = vector.broadcast %cst_22 : f32 to vector<1x128xf32>
    %59 = arith.addf %58, %57 : vector<1x128xf32>
    %60 = arith.divf %58, %59 : vector<1x128xf32>
    %61 = vector.extract_strided_slice %60 {offsets = [0, 0], sizes = [1, 32], strides = [1, 1]} : vector<1x128xf32> to vector<1x32xf32>
    %62 = vector.extract_strided_slice %60 {offsets = [0, 32], sizes = [1, 32], strides = [1, 1]} : vector<1x128xf32> to vector<1x32xf32>
    %63 = vector.extract_strided_slice %60 {offsets = [0, 64], sizes = [1, 32], strides = [1, 1]} : vector<1x128xf32> to vector<1x32xf32>
    %cst_23 = arith.constant 2.000000e+00 : f32
    %64 = vector.broadcast %cst_23 : f32 to vector<1x32xf32>
    %65 = arith.mulf %64, %63 : vector<1x32xf32>
    %cst_24 = arith.constant 1.000000e+00 : f32
    %66 = vector.broadcast %cst_24 : f32 to vector<1x32xf32>
    %67 = arith.subf %65, %66 : vector<1x32xf32>
    %68 = vector.extract_strided_slice %60 {offsets = [0, 96], sizes = [1, 32], strides = [1, 1]} : vector<1x128xf32> to vector<1x32xf32>
    %69 = arith.mulf %62, %49 : vector<1x32xf32>
    %70 = arith.mulf %61, %67 : vector<1x32xf32>
    %71 = arith.addf %69, %70 : vector<1x32xf32>
    %72 = math.tanh %71 : vector<1x32xf32>
    %73 = arith.mulf %68, %72 : vector<1x32xf32>
    %74 = vector.extract_strided_slice %5 {offsets = [3, 0], sizes = [1, 128], strides = [1, 1]} : vector<8x128xf32> to vector<1x128xf32>
    %c0_25 = arith.constant 0 : index
    %c0_26 = arith.constant 0 : index
    %75 = vector.load %arg2[%c0_25, %c0_26] : memref<32x128xf32, #tpu.memory_space<vmem>>, vector<32x128xf32>
    %cst_27 = arith.constant dense<0.000000e+00> : vector<1x128xf32>
    %76 = tpu.matmul %73, %75, %cst_27 {dimension_numbers = #tpu.dot_dimension_numbers<[1], [0], [0], [1], [0, 0, 1, 1], [], []>} : vector<1x32xf32>, vector<32x128xf32>, vector<1x128xf32> -> vector<1x128xf32>
    %77 = arith.addf %74, %76 : vector<1x128xf32>
    %78 = arith.negf %77 : vector<1x128xf32>
    %79 = math.exp %78 : vector<1x128xf32>
    %cst_28 = arith.constant 1.000000e+00 : f32
    %80 = vector.broadcast %cst_28 : f32 to vector<1x128xf32>
    %81 = arith.addf %80, %79 : vector<1x128xf32>
    %82 = arith.divf %80, %81 : vector<1x128xf32>
    %83 = vector.extract_strided_slice %82 {offsets = [0, 0], sizes = [1, 32], strides = [1, 1]} : vector<1x128xf32> to vector<1x32xf32>
    %84 = vector.extract_strided_slice %82 {offsets = [0, 32], sizes = [1, 32], strides = [1, 1]} : vector<1x128xf32> to vector<1x32xf32>
    %85 = vector.extract_strided_slice %82 {offsets = [0, 64], sizes = [1, 32], strides = [1, 1]} : vector<1x128xf32> to vector<1x32xf32>
    %cst_29 = arith.constant 2.000000e+00 : f32
    %86 = vector.broadcast %cst_29 : f32 to vector<1x32xf32>
    %87 = arith.mulf %86, %85 : vector<1x32xf32>
    %cst_30 = arith.constant 1.000000e+00 : f32
    %88 = vector.broadcast %cst_30 : f32 to vector<1x32xf32>
    %89 = arith.subf %87, %88 : vector<1x32xf32>
    %90 = vector.extract_strided_slice %82 {offsets = [0, 96], sizes = [1, 32], strides = [1, 1]} : vector<1x128xf32> to vector<1x32xf32>
    %91 = arith.mulf %84, %71 : vector<1x32xf32>
    %92 = arith.mulf %83, %89 : vector<1x32xf32>
    %93 = arith.addf %91, %92 : vector<1x32xf32>
    %94 = math.tanh %93 : vector<1x32xf32>
    %95 = arith.mulf %90, %94 : vector<1x32xf32>
    %96 = vector.extract_strided_slice %5 {offsets = [4, 0], sizes = [1, 128], strides = [1, 1]} : vector<8x128xf32> to vector<1x128xf32>
    %c0_31 = arith.constant 0 : index
    %c0_32 = arith.constant 0 : index
    %97 = vector.load %arg2[%c0_31, %c0_32] : memref<32x128xf32, #tpu.memory_space<vmem>>, vector<32x128xf32>
    %cst_33 = arith.constant dense<0.000000e+00> : vector<1x128xf32>
    %98 = tpu.matmul %95, %97, %cst_33 {dimension_numbers = #tpu.dot_dimension_numbers<[1], [0], [0], [1], [0, 0, 1, 1], [], []>} : vector<1x32xf32>, vector<32x128xf32>, vector<1x128xf32> -> vector<1x128xf32>
    %99 = arith.addf %96, %98 : vector<1x128xf32>
    %100 = arith.negf %99 : vector<1x128xf32>
    %101 = math.exp %100 : vector<1x128xf32>
    %cst_34 = arith.constant 1.000000e+00 : f32
    %102 = vector.broadcast %cst_34 : f32 to vector<1x128xf32>
    %103 = arith.addf %102, %101 : vector<1x128xf32>
    %104 = arith.divf %102, %103 : vector<1x128xf32>
    %105 = vector.extract_strided_slice %104 {offsets = [0, 0], sizes = [1, 32], strides = [1, 1]} : vector<1x128xf32> to vector<1x32xf32>
    %106 = vector.extract_strided_slice %104 {offsets = [0, 32], sizes = [1, 32], strides = [1, 1]} : vector<1x128xf32> to vector<1x32xf32>
    %107 = vector.extract_strided_slice %104 {offsets = [0, 64], sizes = [1, 32], strides = [1, 1]} : vector<1x128xf32> to vector<1x32xf32>
    %cst_35 = arith.constant 2.000000e+00 : f32
    %108 = vector.broadcast %cst_35 : f32 to vector<1x32xf32>
    %109 = arith.mulf %108, %107 : vector<1x32xf32>
    %cst_36 = arith.constant 1.000000e+00 : f32
    %110 = vector.broadcast %cst_36 : f32 to vector<1x32xf32>
    %111 = arith.subf %109, %110 : vector<1x32xf32>
    %112 = vector.extract_strided_slice %104 {offsets = [0, 96], sizes = [1, 32], strides = [1, 1]} : vector<1x128xf32> to vector<1x32xf32>
    %113 = arith.mulf %106, %93 : vector<1x32xf32>
    %114 = arith.mulf %105, %111 : vector<1x32xf32>
    %115 = arith.addf %113, %114 : vector<1x32xf32>
    %116 = math.tanh %115 : vector<1x32xf32>
    %117 = arith.mulf %112, %116 : vector<1x32xf32>
    %118 = vector.extract_strided_slice %5 {offsets = [5, 0], sizes = [1, 128], strides = [1, 1]} : vector<8x128xf32> to vector<1x128xf32>
    %c0_37 = arith.constant 0 : index
    %c0_38 = arith.constant 0 : index
    %119 = vector.load %arg2[%c0_37, %c0_38] : memref<32x128xf32, #tpu.memory_space<vmem>>, vector<32x128xf32>
    %cst_39 = arith.constant dense<0.000000e+00> : vector<1x128xf32>
    %120 = tpu.matmul %117, %119, %cst_39 {dimension_numbers = #tpu.dot_dimension_numbers<[1], [0], [0], [1], [0, 0, 1, 1], [], []>} : vector<1x32xf32>, vector<32x128xf32>, vector<1x128xf32> -> vector<1x128xf32>
    %121 = arith.addf %118, %120 : vector<1x128xf32>
    %122 = arith.negf %121 : vector<1x128xf32>
    %123 = math.exp %122 : vector<1x128xf32>
    %cst_40 = arith.constant 1.000000e+00 : f32
    %124 = vector.broadcast %cst_40 : f32 to vector<1x128xf32>
    %125 = arith.addf %124, %123 : vector<1x128xf32>
    %126 = arith.divf %124, %125 : vector<1x128xf32>
    %127 = vector.extract_strided_slice %126 {offsets = [0, 0], sizes = [1, 32], strides = [1, 1]} : vector<1x128xf32> to vector<1x32xf32>
    %128 = vector.extract_strided_slice %126 {offsets = [0, 32], sizes = [1, 32], strides = [1, 1]} : vector<1x128xf32> to vector<1x32xf32>
    %129 = vector.extract_strided_slice %126 {offsets = [0, 64], sizes = [1, 32], strides = [1, 1]} : vector<1x128xf32> to vector<1x32xf32>
    %cst_41 = arith.constant 2.000000e+00 : f32
    %130 = vector.broadcast %cst_41 : f32 to vector<1x32xf32>
    %131 = arith.mulf %130, %129 : vector<1x32xf32>
    %cst_42 = arith.constant 1.000000e+00 : f32
    %132 = vector.broadcast %cst_42 : f32 to vector<1x32xf32>
    %133 = arith.subf %131, %132 : vector<1x32xf32>
    %134 = vector.extract_strided_slice %126 {offsets = [0, 96], sizes = [1, 32], strides = [1, 1]} : vector<1x128xf32> to vector<1x32xf32>
    %135 = arith.mulf %128, %115 : vector<1x32xf32>
    %136 = arith.mulf %127, %133 : vector<1x32xf32>
    %137 = arith.addf %135, %136 : vector<1x32xf32>
    %138 = math.tanh %137 : vector<1x32xf32>
    %139 = arith.mulf %134, %138 : vector<1x32xf32>
    %140 = vector.extract_strided_slice %5 {offsets = [6, 0], sizes = [1, 128], strides = [1, 1]} : vector<8x128xf32> to vector<1x128xf32>
    %c0_43 = arith.constant 0 : index
    %c0_44 = arith.constant 0 : index
    %141 = vector.load %arg2[%c0_43, %c0_44] : memref<32x128xf32, #tpu.memory_space<vmem>>, vector<32x128xf32>
    %cst_45 = arith.constant dense<0.000000e+00> : vector<1x128xf32>
    %142 = tpu.matmul %139, %141, %cst_45 {dimension_numbers = #tpu.dot_dimension_numbers<[1], [0], [0], [1], [0, 0, 1, 1], [], []>} : vector<1x32xf32>, vector<32x128xf32>, vector<1x128xf32> -> vector<1x128xf32>
    %143 = arith.addf %140, %142 : vector<1x128xf32>
    %144 = arith.negf %143 : vector<1x128xf32>
    %145 = math.exp %144 : vector<1x128xf32>
    %cst_46 = arith.constant 1.000000e+00 : f32
    %146 = vector.broadcast %cst_46 : f32 to vector<1x128xf32>
    %147 = arith.addf %146, %145 : vector<1x128xf32>
    %148 = arith.divf %146, %147 : vector<1x128xf32>
    %149 = vector.extract_strided_slice %148 {offsets = [0, 0], sizes = [1, 32], strides = [1, 1]} : vector<1x128xf32> to vector<1x32xf32>
    %150 = vector.extract_strided_slice %148 {offsets = [0, 32], sizes = [1, 32], strides = [1, 1]} : vector<1x128xf32> to vector<1x32xf32>
    %151 = vector.extract_strided_slice %148 {offsets = [0, 64], sizes = [1, 32], strides = [1, 1]} : vector<1x128xf32> to vector<1x32xf32>
    %cst_47 = arith.constant 2.000000e+00 : f32
    %152 = vector.broadcast %cst_47 : f32 to vector<1x32xf32>
    %153 = arith.mulf %152, %151 : vector<1x32xf32>
    %cst_48 = arith.constant 1.000000e+00 : f32
    %154 = vector.broadcast %cst_48 : f32 to vector<1x32xf32>
    %155 = arith.subf %153, %154 : vector<1x32xf32>
    %156 = vector.extract_strided_slice %148 {offsets = [0, 96], sizes = [1, 32], strides = [1, 1]} : vector<1x128xf32> to vector<1x32xf32>
    %157 = arith.mulf %150, %137 : vector<1x32xf32>
    %158 = arith.mulf %149, %155 : vector<1x32xf32>
    %159 = arith.addf %157, %158 : vector<1x32xf32>
    %160 = math.tanh %159 : vector<1x32xf32>
    %161 = arith.mulf %156, %160 : vector<1x32xf32>
    %162 = vector.extract_strided_slice %5 {offsets = [7, 0], sizes = [1, 128], strides = [1, 1]} : vector<8x128xf32> to vector<1x128xf32>
    %c0_49 = arith.constant 0 : index
    %c0_50 = arith.constant 0 : index
    %163 = vector.load %arg2[%c0_49, %c0_50] : memref<32x128xf32, #tpu.memory_space<vmem>>, vector<32x128xf32>
    %cst_51 = arith.constant dense<0.000000e+00> : vector<1x128xf32>
    %164 = tpu.matmul %161, %163, %cst_51 {dimension_numbers = #tpu.dot_dimension_numbers<[1], [0], [0], [1], [0, 0, 1, 1], [], []>} : vector<1x32xf32>, vector<32x128xf32>, vector<1x128xf32> -> vector<1x128xf32>
    %165 = arith.addf %162, %164 : vector<1x128xf32>
    %166 = arith.negf %165 : vector<1x128xf32>
    %167 = math.exp %166 : vector<1x128xf32>
    %cst_52 = arith.constant 1.000000e+00 : f32
    %168 = vector.broadcast %cst_52 : f32 to vector<1x128xf32>
    %169 = arith.addf %168, %167 : vector<1x128xf32>
    %170 = arith.divf %168, %169 : vector<1x128xf32>
    %171 = vector.extract_strided_slice %170 {offsets = [0, 0], sizes = [1, 32], strides = [1, 1]} : vector<1x128xf32> to vector<1x32xf32>
    %172 = vector.extract_strided_slice %170 {offsets = [0, 32], sizes = [1, 32], strides = [1, 1]} : vector<1x128xf32> to vector<1x32xf32>
    %173 = vector.extract_strided_slice %170 {offsets = [0, 64], sizes = [1, 32], strides = [1, 1]} : vector<1x128xf32> to vector<1x32xf32>
    %cst_53 = arith.constant 2.000000e+00 : f32
    %174 = vector.broadcast %cst_53 : f32 to vector<1x32xf32>
    %175 = arith.mulf %174, %173 : vector<1x32xf32>
    %cst_54 = arith.constant 1.000000e+00 : f32
    %176 = vector.broadcast %cst_54 : f32 to vector<1x32xf32>
    %177 = arith.subf %175, %176 : vector<1x32xf32>
    %178 = vector.extract_strided_slice %170 {offsets = [0, 96], sizes = [1, 32], strides = [1, 1]} : vector<1x128xf32> to vector<1x32xf32>
    %179 = arith.mulf %172, %159 : vector<1x32xf32>
    %180 = arith.mulf %171, %177 : vector<1x32xf32>
    %181 = arith.addf %179, %180 : vector<1x32xf32>
    %182 = math.tanh %181 : vector<1x32xf32>
    %183 = arith.mulf %178, %182 : vector<1x32xf32>
    %c0_55 = arith.constant 0 : index
    %c0_56 = arith.constant 0 : index
    %184 = vector.load %arg4[%c0_55, %c0_56] : memref<32x4xf32, #tpu.memory_space<vmem>>, vector<32x4xf32>
    %cst_57 = arith.constant dense<0.000000e+00> : vector<1x4xf32>
    %185 = tpu.matmul %183, %184, %cst_57 {dimension_numbers = #tpu.dot_dimension_numbers<[1], [0], [0], [1], [0, 0, 1, 1], [], []>} : vector<1x32xf32>, vector<32x4xf32>, vector<1x4xf32> -> vector<1x4xf32>
    %c0_58 = arith.constant 0 : index
    %c0_59 = arith.constant 0 : index
    %186 = vector.load %arg5[%c0_58, %c0_59] : memref<1x4xf32, #tpu.memory_space<vmem>>, vector<1x4xf32>
    %187 = arith.addf %185, %186 : vector<1x4xf32>
    %c0_60 = arith.constant 0 : index
    %c0_61 = arith.constant 0 : index
    %188 = vector.load %arg6[%c0_60, %c0_61] : memref<1x4xf32, #tpu.memory_space<vmem>>, vector<1x4xf32>
    tpu.vector_store %arg6[%c0_60, %c0_61], %187 {strides = array<i32>} : memref<1x4xf32, #tpu.memory_space<vmem>>, vector<1x4xf32>,
    return
  }
}

</mosaic_0001>

<llo_original>
// kernel: tpu_custom_call.1
$region0: #{tpu_custom_call.1}
  #allocation0 [shape = 'u32[]', space=smem, size = 0x4, offset = 0x4, fixed_abs, tag = 'smem constant byte address 0x4 - core index']
  #allocation1 [shape = 'u32[144,128]{1,0:T(1,128)}', space=vmem, size = 0x12000, scoped, tag = 'internal scratch']
  %s0 = inlined_call_operand.vmem [shape: f32[8,4], index: 0, kind: input, shape index: {}]
  %s1 = inlined_call_operand.vmem [shape: f32[4,128], index: 1, kind: input, shape index: {}]
  %s2 = inlined_call_operand.vmem [shape: f32[32,128], index: 2, kind: input, shape index: {}]
  %s3 = inlined_call_operand.vmem [shape: f32[1,128], index: 3, kind: input, shape index: {}]
  %s4 = inlined_call_operand.vmem [shape: f32[32,4], index: 4, kind: input, shape index: {}]
  %s5 = inlined_call_operand.vmem [shape: f32[1,4], index: 5, kind: input, shape index: {}]
  %s6 = inlined_call_operand.hbm [shape: f32[1,4], index: 6, kind: output, shape index: {}]
  %s7 = sld [smem:[#allocation0]]
  $region34: #{tpu_custom_call.1} parent=0
    _
  %s9 = ssub.s32 1, %s7
  %s10 = scalar_select 0, %s9, %s7
  $region1: #{tpu_custom_call.1} parent=0
    #allocation2 [shape = 'u8[512]{0}', space=vmem, size = 0x400, scoped, tag = 'output window, operand 0, single buffered']
    #allocation3 [shape = 's32[1]{0}', space=sflag, size = 0x4, scoped, tag = 'scoped memory for tpu_custom_call.1']
    %11 = vsyncpa [#allocation3], 0
    // Predicated region
    $region2: #{tpu_custom_call.1} parent=1 // pred_check
      _
    $region3: #{tpu_custom_call.1} parent=1 // pred_check_branch
      %13 = sbr.rel (0) target = $region5
    $region4: #{tpu_custom_call.1} parent=1 // pred_region
      _
    $region5: #{tpu_custom_call.1} parent=1 // pred_fallthru
      _
    // Predicated region
    $region6: #{tpu_custom_call.1} parent=1 // pred_check
      _
    $region7: #{tpu_custom_call.1} parent=1 // pred_check_branch
      %15 = sbr.rel (0) target = $region9
    $region8: #{tpu_custom_call.1} parent=1 // pred_region
      _
    $region9: #{tpu_custom_call.1} parent=1 // pred_fallthru
      _
    // Predicated region
    $region10: #{tpu_custom_call.1} parent=1 // pred_check
      _
    $region11: #{tpu_custom_call.1} parent=1 // pred_check_branch
      %17 = sbr.rel (0) target = $region13
    $region12: #{tpu_custom_call.1} parent=1 // pred_region
      _
    $region13: #{tpu_custom_call.1} parent=1 // pred_fallthru
      _
    // Predicated region
    $region14: #{tpu_custom_call.1} parent=1 // pred_check
      _
    $region15: #{tpu_custom_call.1} parent=1 // pred_check_branch
      %19 = sbr.rel (0) target = $region17
    $region16: #{tpu_custom_call.1} parent=1 // pred_region
      _
    $region17: #{tpu_custom_call.1} parent=1 // pred_fallthru
      _
    // Predicated region
    $region18: #{tpu_custom_call.1} parent=1 // pred_check
      _
    $region19: #{tpu_custom_call.1} parent=1 // pred_check_branch
      %21 = sbr.rel (0) target = $region21
    $region20: #{tpu_custom_call.1} parent=1 // pred_region
      _
    $region21: #{tpu_custom_call.1} parent=1 // pred_fallthru
      _
    // Predicated region
    $region22: #{tpu_custom_call.1} parent=1 // pred_check
      _
    $region23: #{tpu_custom_call.1} parent=1 // pred_check_branch
      %23 = sbr.rel (0) target = $region25
    $region24: #{tpu_custom_call.1} parent=1 // pred_region
      _
    $region25: #{tpu_custom_call.1} parent=1 // pred_fallthru
      _
    %v24 = vld [vmem:[%s0] sm:$0xff]
    %v25 = vld [vmem:[%s1] sm:$0xf]
    %v26 = vld [vmem:[%s3] sm:$0x1]
    %v28 = vlaneseq
    %v29 = vshrl.u32 %v28, 7
    %v30 = vsub.s32 0, %v29
    %v31 = vrot.slane %v26, %v30
    %vm33 = vcmask 31744
    %v35 = vsel %vm33, %v24, 0
    %vm37 = vcmask 1043456
    %v39 = vsel %vm37, %v25, 0
    %41 = vmatprep.subr.mxu0 0.0
    %42 = vmatpush1.msra.mxu0 0.0
    %43 = vmatprep.subr.mxu0 0.0
    %44 = vmatpush1.msra.mxu0 0.0
    %45 = vmatprep.subr.mxu0 0.0
    %46 = vmatpush1.msra.mxu0 0.0
    %47 = vmatprep.subr.mxu0 0.0
    %48 = vmatpush1.msra.mxu0 0.0
    %49 = vmatprep.subr.mxu0 0.0
    %50 = vmatpush1.msra.mxu0 0.0
    %51 = vmatprep.subr.mxu0 0.0
    %52 = vmatpush1.msra.mxu0 0.0
    %53 = vmatprep.subr.mxu0 0.0
    %54 = vmatpush1.msra.mxu0 0.0
    %55 = vmatprep.subr.mxu0 0.0
    %56 = vmatpush1.msra.mxu0 0.0
    %57 = vmatprep.subr.mxu0 0.0
    %58 = vmatpush1.msra.mxu0 0.0
    %59 = vmatprep.subr.mxu0 0.0
    %60 = vmatpush1.msra.mxu0 0.0
    %61 = vmatprep.subr.mxu0 0.0
    %62 = vmatpush1.msra.mxu0 0.0
    %63 = vmatprep.subr.mxu0 0.0
    %64 = vmatpush1.msra.mxu0 0.0
    %65 = vmatprep.subr.mxu0 0.0
    %66 = vmatpush1.msra.mxu0 0.0
    %67 = vmatprep.subr.mxu0 0.0
    %68 = vmatpush1.msra.mxu0 0.0
    %69 = vmatprep.subr.mxu0 0.0
    %70 = vmatpush1.msra.mxu0 0.0
    %71 = vmatprep.subr.mxu0 0.0
    %72 = vmatpush1.msra.mxu0 %v39
    %73 = vmatprep.subr.mxu0 0.0
    %74 = vmatpush2.msra.mxu0 0.0
    %75 = vmatprep.subr.mxu0 0.0
    %76 = vmatpush2.msra.mxu0 0.0
    %77 = vmatprep.subr.mxu0 0.0
    %78 = vmatpush2.msra.mxu0 0.0
    %79 = vmatprep.subr.mxu0 0.0
    %80 = vmatpush2.msra.mxu0 0.0
    %81 = vmatprep.subr.mxu0 0.0
    %82 = vmatpush2.msra.mxu0 0.0
    %83 = vmatprep.subr.mxu0 0.0
    %84 = vmatpush2.msra.mxu0 0.0
    %85 = vmatprep.subr.mxu0 0.0
    %86 = vmatpush2.msra.mxu0 0.0
    %87 = vmatprep.subr.mxu0 0.0
    %88 = vmatpush2.msra.mxu0 0.0
    %89 = vmatprep.subr.mxu0 0.0
    %90 = vmatpush2.msra.mxu0 0.0
    %91 = vmatprep.subr.mxu0 0.0
    %92 = vmatpush2.msra.mxu0 0.0
    %93 = vmatprep.subr.mxu0 0.0
    %94 = vmatpush2.msra.mxu0 0.0
    %95 = vmatprep.subr.mxu0 0.0
    %96 = vmatpush2.msra.mxu0 0.0
    %97 = vmatprep.subr.mxu0 0.0
    %98 = vmatpush2.msra.mxu0 0.0
    %99 = vmatprep.subr.mxu0 0.0
    %100 = vmatpush2.msra.mxu0 0.0
    %101 = vmatprep.subr.mxu0 0.0
    %102 = vmatpush2.msra.mxu0 0.0
    %103 = vmatprep.subr.mxu0 0.0
    %104 = vmatpush2.msra.mxu0 0.0
    %105 = vmatprep.mubr.f32.mxu0 0.0
    %106 = vmatmul.mubr.f32.gmra.mxu0 %v35
    %v107 = vpop.f32.mrf.mxu0
    %v108 = vadd.f32 %v31, %v107
    %v109 = vpop.f32.mrf.mxu0
    %110 = vdwg.mxu0
    %v111 = vld [vmem:[%s2] sm:$0xff]
    %v112 = vld [vmem:[%s2 + $0x8] sm:$0xff]
    %v113 = vld [vmem:[%s2 + $0x10] sm:$0xff]
    %v114 = vld [vmem:[%s2 + $0x18] sm:$0xff]
    %vm115 = vcmask 261120
    %v117 = vsel %vm115, 0.0, 0
    %119 = vmatprep.subr.mxu0 0.0
    %120 = vmatpush1.msra.mxu0 0.0
    %121 = vmatprep.subr.mxu0 0.0
    %122 = vmatpush1.msra.mxu0 0.0
    %123 = vmatprep.subr.mxu0 0.0
    %124 = vmatpush1.msra.mxu0 0.0
    %125 = vmatprep.subr.mxu0 0.0
    %126 = vmatpush1.msra.mxu0 0.0
    %127 = vmatprep.subr.mxu0 0.0
    %128 = vmatpush1.msra.mxu0 0.0
    %129 = vmatprep.subr.mxu0 0.0
    %130 = vmatpush1.msra.mxu0 0.0
    %131 = vmatprep.subr.mxu0 0.0
    %132 = vmatpush1.msra.mxu0 0.0
    %133 = vmatprep.subr.mxu0 0.0
    %134 = vmatpush1.msra.mxu0 0.0
    %135 = vmatprep.subr.mxu0 0.0
    %136 = vmatpush1.msra.mxu0 0.0
    %137 = vmatprep.subr.mxu0 0.0
    %138 = vmatpush1.msra.mxu0 0.0
    %139 = vmatprep.subr.mxu0 0.0
    %140 = vmatpush1.msra.mxu0 0.0
    %141 = vmatprep.subr.mxu0 0.0
    %142 = vmatpush1.msra.mxu0 0.0
    %143 = vmatprep.subr.mxu0 0.0
    %144 = vmatpush1.msra.mxu0 %v114
    %145 = vmatprep.subr.mxu0 0.0
    %146 = vmatpush1.msra.mxu0 %v113
    %147 = vmatprep.subr.mxu0 0.0
    %148 = vmatpush1.msra.mxu0 %v112
    %149 = vmatprep.subr.mxu0 0.0
    %150 = vmatpush1.msra.mxu0 %v111
    %151 = vmatprep.subr.mxu0 0.0
    %152 = vmatpush2.msra.mxu0 0.0
    %153 = vmatprep.subr.mxu0 0.0
    %154 = vmatpush2.msra.mxu0 0.0
    %155 = vmatprep.subr.mxu0 0.0
    %156 = vmatpush2.msra.mxu0 0.0
    %157 = vmatprep.subr.mxu0 0.0
    %158 = vmatpush2.msra.mxu0 0.0
    %159 = vmatprep.subr.mxu0 0.0
    %160 = vmatpush2.msra.mxu0 0.0
    %161 = vmatprep.subr.mxu0 0.0
    %162 = vmatpush2.msra.mxu0 0.0
    %163 = vmatprep.subr.mxu0 0.0
    %164 = vmatpush2.msra.mxu0 0.0
    %165 = vmatprep.subr.mxu0 0.0
    %166 = vmatpush2.msra.mxu0 0.0
    %167 = vmatprep.subr.mxu0 0.0
    %168 = vmatpush2.msra.mxu0 0.0
    %169 = vmatprep.subr.mxu0 0.0
    %170 = vmatpush2.msra.mxu0 0.0
    %171 = vmatprep.subr.mxu0 0.0
    %172 = vmatpush2.msra.mxu0 0.0
    %173 = vmatprep.subr.mxu0 0.0
    %174 = vmatpush2.msra.mxu0 0.0
    %175 = vmatprep.subr.mxu0 0.0
    %176 = vmatpush2.msra.mxu0 0.0
    %177 = vmatprep.subr.mxu0 0.0
    %178 = vmatpush2.msra.mxu0 0.0
    %179 = vmatprep.subr.mxu0 0.0
    %180 = vmatpush2.msra.mxu0 0.0
    %181 = vmatprep.subr.mxu0 0.0
    %182 = vmatpush2.msra.mxu0 0.0
    %183 = vmatprep.mubr.f32.mxu0 0.0
    %184 = vmatmul.mubr.f32.gmra.mxu0 %v117
    %v185 = vpop.f32.mrf.mxu0
    %v186 = vadd.f32 0.0, %v185
    %v187 = vpop.f32.mrf.mxu0
    %188 = vdwg.mxu0
    %v189 = vadd.f32 %v108, %v186
    %v190 = vxor.u32 %v189, 2147483648
    %v191 = vmul.f32 %v190, 1.442695
    %v192 = vpow.pop %v191
    %v193 = vadd.f32 %v192, 1.0
    %v194 = vrcp.pop %v193
    %v195 = vmul.f32 1.0, %v194
    %v196 = vmul.f32 %v195, 2.0
    %v197 = vsub.f32 %v196, 1.0
    %v198 = vmul.f32 %v195, 0.0
    %200 = vrot.lane.b32.xlu0 %v197, 64
    %v201 = vpop.permute.xlu0 %200
    %v203 = vmul.f32 %v195, %v201
    %205 = vrot.lane.b32.xlu0 %v203, 32
    %v206 = vpop.permute.xlu0 %205
    %v208 = vadd.f32 %v198, %v206
    %v209 = vtanh.pop %v208
    %211 = vrot.lane.b32.xlu0 %v209, 64
    %v212 = vpop.permute.xlu0 %211
    %v214 = vmul.f32 %v195, %v212
    %216 = vrot.lane.b32.xlu0 %v214, 32
    %v217 = vpop.permute.xlu0 %216
    %v218 = vsel %vm115, %v217, 0
    %220 = vmatprep.subr.mxu0 0.0
    %221 = vmatpush1.msra.mxu0 0.0
    %222 = vmatprep.subr.mxu0 0.0
    %223 = vmatpush1.msra.mxu0 0.0
    %224 = vmatprep.subr.mxu0 0.0
    %225 = vmatpush1.msra.mxu0 0.0
    %226 = vmatprep.subr.mxu0 0.0
    %227 = vmatpush1.msra.mxu0 0.0
    %228 = vmatprep.subr.mxu0 0.0
    %229 = vmatpush1.msra.mxu0 0.0
    %230 = vmatprep.subr.mxu0 0.0
    %231 = vmatpush1.msra.mxu0 0.0
    %232 = vmatprep.subr.mxu0 0.0
    %233 = vmatpush1.msra.mxu0 0.0
    %234 = vmatprep.subr.mxu0 0.0
    %235 = vmatpush1.msra.mxu0 0.0
    %236 = vmatprep.subr.mxu0 0.0
    %237 = vmatpush1.msra.mxu0 0.0
    %238 = vmatprep.subr.mxu0 0.0
    %239 = vmatpush1.msra.mxu0 0.0
    %240 = vmatprep.subr.mxu0 0.0
    %241 = vmatpush1.msra.mxu0 0.0
    %242 = vmatprep.subr.mxu0 0.0
    %243 = vmatpush1.msra.mxu0 0.0
    %244 = vmatprep.subr.mxu0 0.0
    %245 = vmatpush1.msra.mxu0 %v114
    %246 = vmatprep.subr.mxu0 0.0
    %247 = vmatpush1.msra.mxu0 %v113
    %248 = vmatprep.subr.mxu0 0.0
    %249 = vmatpush1.msra.mxu0 %v112
    %250 = vmatprep.subr.mxu0 0.0
    %251 = vmatpush1.msra.mxu0 %v111
    %252 = vmatprep.subr.mxu0 0.0
    %253 = vmatpush2.msra.mxu0 0.0
    %254 = vmatprep.subr.mxu0 0.0
    %255 = vmatpush2.msra.mxu0 0.0
    %256 = vmatprep.subr.mxu0 0.0
    %257 = vmatpush2.msra.mxu0 0.0
    %258 = vmatprep.subr.mxu0 0.0
    %259 = vmatpush2.msra.mxu0 0.0
    %260 = vmatprep.subr.mxu0 0.0
    %261 = vmatpush2.msra.mxu0 0.0
    %262 = vmatprep.subr.mxu0 0.0
    %263 = vmatpush2.msra.mxu0 0.0
    %264 = vmatprep.subr.mxu0 0.0
    %265 = vmatpush2.msra.mxu0 0.0
    %266 = vmatprep.subr.mxu0 0.0
    %267 = vmatpush2.msra.mxu0 0.0
    %268 = vmatprep.subr.mxu0 0.0
    %269 = vmatpush2.msra.mxu0 0.0
    %270 = vmatprep.subr.mxu0 0.0
    %271 = vmatpush2.msra.mxu0 0.0
    %272 = vmatprep.subr.mxu0 0.0
    %273 = vmatpush2.msra.mxu0 0.0
    %274 = vmatprep.subr.mxu0 0.0
    %275 = vmatpush2.msra.mxu0 0.0
    %276 = vmatprep.subr.mxu0 0.0
    %277 = vmatpush2.msra.mxu0 0.0
    %278 = vmatprep.subr.mxu0 0.0
    %279 = vmatpush2.msra.mxu0 0.0
    %280 = vmatprep.subr.mxu0 0.0
    %281 = vmatpush2.msra.mxu0 0.0
    %282 = vmatprep.subr.mxu0 0.0
    %283 = vmatpush2.msra.mxu0 0.0
    %284 = vmatprep.mubr.f32.mxu0 0.0
    %285 = vmatmul.mubr.f32.gmra.mxu0 %v218
    %v286 = vpop.f32.mrf.mxu0
    %v287 = vadd.f32 0.0, %v286
    %v288 = vpop.f32.mrf.mxu0
    %289 = vdwg.mxu0
    %v291 = vrot.slane %v287, 7
    %v293 = vadd.f32 %v108, %v291
    %v294 = vxor.u32 %v293, 2147483648
    %v295 = vmul.f32 %v294, 1.442695
    %v296 = vpow.pop %v295
    %v297 = vadd.f32 %v296, 1.0
    %v298 = vrcp.pop %v297
    %v299 = vmul.f32 1.0, %v298
    %v300 = vmul.f32 %v299, 2.0
    %v301 = vsub.f32 %v300, 1.0
    %v303 = vrot.slane %v208, 7
    %v305 = vmul.f32 %v299, %v303
    %307 = vrot.lane.b32.xlu0 %v301, 64
    %v308 = vpop.permute.xlu0 %307
    %v310 = vmul.f32 %v299, %v308
    %312 = vrot.lane.b32.xlu0 %v310, 32
    %v313 = vpop.permute.xlu0 %312
    %v315 = vadd.f32 %v305, %v313
    %v316 = vtanh.pop %v315
    %318 = vrot.lane.b32.xlu0 %v316, 64
    %v319 = vpop.permute.xlu0 %318
    %v321 = vmul.f32 %v299, %v319
    %v323 = vrot.slane %v321, 1
    %324 = vrot.lane.b32.xlu0 %v323, 32
    %v325 = vpop.permute.xlu0 %324
    %v326 = vsel %vm115, %v325, 0
    %328 = vmatprep.subr.mxu0 0.0
    %329 = vmatpush1.msra.mxu0 0.0
    %330 = vmatprep.subr.mxu0 0.0
    %331 = vmatpush1.msra.mxu0 0.0
    %332 = vmatprep.subr.mxu0 0.0
    %333 = vmatpush1.msra.mxu0 0.0
    %334 = vmatprep.subr.mxu0 0.0
    %335 = vmatpush1.msra.mxu0 0.0
    %336 = vmatprep.subr.mxu0 0.0
    %337 = vmatpush1.msra.mxu0 0.0
    %338 = vmatprep.subr.mxu0 0.0
    %339 = vmatpush1.msra.mxu0 0.0
    %340 = vmatprep.subr.mxu0 0.0
    %341 = vmatpush1.msra.mxu0 0.0
    %342 = vmatprep.subr.mxu0 0.0
    %343 = vmatpush1.msra.mxu0 0.0
    %344 = vmatprep.subr.mxu0 0.0
    %345 = vmatpush1.msra.mxu0 0.0
    %346 = vmatprep.subr.mxu0 0.0
    %347 = vmatpush1.msra.mxu0 0.0
    %348 = vmatprep.subr.mxu0 0.0
    %349 = vmatpush1.msra.mxu0 0.0
    %350 = vmatprep.subr.mxu0 0.0
    %351 = vmatpush1.msra.mxu0 0.0
    %352 = vmatprep.subr.mxu0 0.0
    %353 = vmatpush1.msra.mxu0 %v114
    %354 = vmatprep.subr.mxu0 0.0
    %355 = vmatpush1.msra.mxu0 %v113
    %356 = vmatprep.subr.mxu0 0.0
    %357 = vmatpush1.msra.mxu0 %v112
    %358 = vmatprep.subr.mxu0 0.0
    %359 = vmatpush1.msra.mxu0 %v111
    %360 = vmatprep.subr.mxu0 0.0
    %361 = vmatpush2.msra.mxu0 0.0
    %362 = vmatprep.subr.mxu0 0.0
    %363 = vmatpush2.msra.mxu0 0.0
    %364 = vmatprep.subr.mxu0 0.0
    %365 = vmatpush2.msra.mxu0 0.0
    %366 = vmatprep.subr.mxu0 0.0
    %367 = vmatpush2.msra.mxu0 0.0
    %368 = vmatprep.subr.mxu0 0.0
    %369 = vmatpush2.msra.mxu0 0.0
    %370 = vmatprep.subr.mxu0 0.0
    %371 = vmatpush2.msra.mxu0 0.0
    %372 = vmatprep.subr.mxu0 0.0
    %373 = vmatpush2.msra.mxu0 0.0
    %374 = vmatprep.subr.mxu0 0.0
    %375 = vmatpush2.msra.mxu0 0.0
    %376 = vmatprep.subr.mxu0 0.0
    %377 = vmatpush2.msra.mxu0 0.0
    %378 = vmatprep.subr.mxu0 0.0
    %379 = vmatpush2.msra.mxu0 0.0
    %380 = vmatprep.subr.mxu0 0.0
    %381 = vmatpush2.msra.mxu0 0.0
    %382 = vmatprep.subr.mxu0 0.0
    %383 = vmatpush2.msra.mxu0 0.0
    %384 = vmatprep.subr.mxu0 0.0
    %385 = vmatpush2.msra.mxu0 0.0
    %386 = vmatprep.subr.mxu0 0.0
    %387 = vmatpush2.msra.mxu0 0.0
    %388 = vmatprep.subr.mxu0 0.0
    %389 = vmatpush2.msra.mxu0 0.0
    %390 = vmatprep.subr.mxu0 0.0
    %391 = vmatpush2.msra.mxu0 0.0
    %392 = vmatprep.mubr.f32.mxu0 0.0
    %393 = vmatmul.mubr.f32.gmra.mxu0 %v326
    %v394 = vpop.f32.mrf.mxu0
    %v395 = vadd.f32 0.0, %v394
    %v396 = vpop.f32.mrf.mxu0
    %397 = vdwg.mxu0
    %v399 = vrot.slane %v395, 6
    %v401 = vadd.f32 %v108, %v399
    %v402 = vxor.u32 %v401, 2147483648
    %v403 = vmul.f32 %v402, 1.442695
    %v404 = vpow.pop %v403
    %v405 = vadd.f32 %v404, 1.0
    %v406 = vrcp.pop %v405
    %v407 = vmul.f32 1.0, %v406
    %v408 = vmul.f32 %v407, 2.0
    %v409 = vsub.f32 %v408, 1.0
    %v411 = vrot.slane %v315, 7
    %v413 = vmul.f32 %v407, %v411
    %415 = vrot.lane.b32.xlu0 %v409, 64
    %v416 = vpop.permute.xlu0 %415
    %v418 = vmul.f32 %v407, %v416
    %420 = vrot.lane.b32.xlu0 %v418, 32
    %v421 = vpop.permute.xlu0 %420
    %v423 = vadd.f32 %v413, %v421
    %v424 = vtanh.pop %v423
    %426 = vrot.lane.b32.xlu0 %v424, 64
    %v427 = vpop.permute.xlu0 %426
    %v429 = vmul.f32 %v407, %v427
    %v431 = vrot.slane %v429, 2
    %432 = vrot.lane.b32.xlu0 %v431, 32
    %v433 = vpop.permute.xlu0 %432
    %v434 = vsel %vm115, %v433, 0
    %436 = vmatprep.subr.mxu0 0.0
    %437 = vmatpush1.msra.mxu0 0.0
    %438 = vmatprep.subr.mxu0 0.0
    %439 = vmatpush1.msra.mxu0 0.0
    %440 = vmatprep.subr.mxu0 0.0
    %441 = vmatpush1.msra.mxu0 0.0
    %442 = vmatprep.subr.mxu0 0.0
    %443 = vmatpush1.msra.mxu0 0.0
    %444 = vmatprep.subr.mxu0 0.0
    %445 = vmatpush1.msra.mxu0 0.0
    %446 = vmatprep.subr.mxu0 0.0
    %447 = vmatpush1.msra.mxu0 0.0
    %448 = vmatprep.subr.mxu0 0.0
    %449 = vmatpush1.msra.mxu0 0.0
    %450 = vmatprep.subr.mxu0 0.0
    %451 = vmatpush1.msra.mxu0 0.0
    %452 = vmatprep.subr.mxu0 0.0
    %453 = vmatpush1.msra.mxu0 0.0
    %454 = vmatprep.subr.mxu0 0.0
    %455 = vmatpush1.msra.mxu0 0.0
    %456 = vmatprep.subr.mxu0 0.0
    %457 = vmatpush1.msra.mxu0 0.0
    %458 = vmatprep.subr.mxu0 0.0
    %459 = vmatpush1.msra.mxu0 0.0
    %460 = vmatprep.subr.mxu0 0.0
    %461 = vmatpush1.msra.mxu0 %v114
    %462 = vmatprep.subr.mxu0 0.0
    %463 = vmatpush1.msra.mxu0 %v113
    %464 = vmatprep.subr.mxu0 0.0
    %465 = vmatpush1.msra.mxu0 %v112
    %466 = vmatprep.subr.mxu0 0.0
    %467 = vmatpush1.msra.mxu0 %v111
    %468 = vmatprep.subr.mxu0 0.0
    %469 = vmatpush2.msra.mxu0 0.0
    %470 = vmatprep.subr.mxu0 0.0
    %471 = vmatpush2.msra.mxu0 0.0
    %472 = vmatprep.subr.mxu0 0.0
    %473 = vmatpush2.msra.mxu0 0.0
    %474 = vmatprep.subr.mxu0 0.0
    %475 = vmatpush2.msra.mxu0 0.0
    %476 = vmatprep.subr.mxu0 0.0
    %477 = vmatpush2.msra.mxu0 0.0
    %478 = vmatprep.subr.mxu0 0.0
    %479 = vmatpush2.msra.mxu0 0.0
    %480 = vmatprep.subr.mxu0 0.0
    %481 = vmatpush2.msra.mxu0 0.0
    %482 = vmatprep.subr.mxu0 0.0
    %483 = vmatpush2.msra.mxu0 0.0
    %484 = vmatprep.subr.mxu0 0.0
    %485 = vmatpush2.msra.mxu0 0.0
    %486 = vmatprep.subr.mxu0 0.0
    %487 = vmatpush2.msra.mxu0 0.0
    %488 = vmatprep.subr.mxu0 0.0
    %489 = vmatpush2.msra.mxu0 0.0
    %490 = vmatprep.subr.mxu0 0.0
    %491 = vmatpush2.msra.mxu0 0.0
    %492 = vmatprep.subr.mxu0 0.0
    %493 = vmatpush2.msra.mxu0 0.0
    %494 = vmatprep.subr.mxu0 0.0
    %495 = vmatpush2.msra.mxu0 0.0
    %496 = vmatprep.subr.mxu0 0.0
    %497 = vmatpush2.msra.mxu0 0.0
    %498 = vmatprep.subr.mxu0 0.0
    %499 = vmatpush2.msra.mxu0 0.0
    %500 = vmatprep.mubr.f32.mxu0 0.0
    %501 = vmatmul.mubr.f32.gmra.mxu0 %v434
    %v502 = vpop.f32.mrf.mxu0
    %v503 = vadd.f32 0.0, %v502
    %v504 = vpop.f32.mrf.mxu0
    %505 = vdwg.mxu0
    %v507 = vrot.slane %v503, 5
    %v509 = vadd.f32 %v108, %v507
    %v510 = vxor.u32 %v509, 2147483648
    %v511 = vmul.f32 %v510, 1.442695
    %v512 = vpow.pop %v511
    %v513 = vadd.f32 %v512, 1.0
    %v514 = vrcp.pop %v513
    %v515 = vmul.f32 1.0, %v514
    %v516 = vmul.f32 %v515, 2.0
    %v517 = vsub.f32 %v516, 1.0
    %v519 = vrot.slane %v423, 7
    %v521 = vmul.f32 %v515, %v519
    %523 = vrot.lane.b32.xlu0 %v517, 64
    %v524 = vpop.permute.xlu0 %523
    %v526 = vmul.f32 %v515, %v524
    %528 = vrot.lane.b32.xlu0 %v526, 32
    %v529 = vpop.permute.xlu0 %528
    %v531 = vadd.f32 %v521, %v529
    %v532 = vtanh.pop %v531
    %534 = vrot.lane.b32.xlu0 %v532, 64
    %v535 = vpop.permute.xlu0 %534
    %v537 = vmul.f32 %v515, %v535
    %v539 = vrot.slane %v537, 3
    %540 = vrot.lane.b32.xlu0 %v539, 32
    %v541 = vpop.permute.xlu0 %540
    %v542 = vsel %vm115, %v541, 0
    %544 = vmatprep.subr.mxu0 0.0
    %545 = vmatpush1.msra.mxu0 0.0
    %546 = vmatprep.subr.mxu0 0.0
    %547 = vmatpush1.msra.mxu0 0.0
    %548 = vmatprep.subr.mxu0 0.0
    %549 = vmatpush1.msra.mxu0 0.0
    %550 = vmatprep.subr.mxu0 0.0
    %551 = vmatpush1.msra.mxu0 0.0
    %552 = vmatprep.subr.mxu0 0.0
    %553 = vmatpush1.msra.mxu0 0.0
    %554 = vmatprep.subr.mxu0 0.0
    %555 = vmatpush1.msra.mxu0 0.0
    %556 = vmatprep.subr.mxu0 0.0
    %557 = vmatpush1.msra.mxu0 0.0
    %558 = vmatprep.subr.mxu0 0.0
    %559 = vmatpush1.msra.mxu0 0.0
    %560 = vmatprep.subr.mxu0 0.0
    %561 = vmatpush1.msra.mxu0 0.0
    %562 = vmatprep.subr.mxu0 0.0
    %563 = vmatpush1.msra.mxu0 0.0
    %564 = vmatprep.subr.mxu0 0.0
    %565 = vmatpush1.msra.mxu0 0.0
    %566 = vmatprep.subr.mxu0 0.0
    %567 = vmatpush1.msra.mxu0 0.0
    %568 = vmatprep.subr.mxu0 0.0
    %569 = vmatpush1.msra.mxu0 %v114
    %570 = vmatprep.subr.mxu0 0.0
    %571 = vmatpush1.msra.mxu0 %v113
    %572 = vmatprep.subr.mxu0 0.0
    %573 = vmatpush1.msra.mxu0 %v112
    %574 = vmatprep.subr.mxu0 0.0
    %575 = vmatpush1.msra.mxu0 %v111
    %576 = vmatprep.subr.mxu0 0.0
    %577 = vmatpush2.msra.mxu0 0.0
    %578 = vmatprep.subr.mxu0 0.0
    %579 = vmatpush2.msra.mxu0 0.0
    %580 = vmatprep.subr.mxu0 0.0
    %581 = vmatpush2.msra.mxu0 0.0
    %582 = vmatprep.subr.mxu0 0.0
    %583 = vmatpush2.msra.mxu0 0.0
    %584 = vmatprep.subr.mxu0 0.0
    %585 = vmatpush2.msra.mxu0 0.0
    %586 = vmatprep.subr.mxu0 0.0
    %587 = vmatpush2.msra.mxu0 0.0
    %588 = vmatprep.subr.mxu0 0.0
    %589 = vmatpush2.msra.mxu0 0.0
    %590 = vmatprep.subr.mxu0 0.0
    %591 = vmatpush2.msra.mxu0 0.0
    %592 = vmatprep.subr.mxu0 0.0
    %593 = vmatpush2.msra.mxu0 0.0
    %594 = vmatprep.subr.mxu0 0.0
    %595 = vmatpush2.msra.mxu0 0.0
    %596 = vmatprep.subr.mxu0 0.0
    %597 = vmatpush2.msra.mxu0 0.0
    %598 = vmatprep.subr.mxu0 0.0
    %599 = vmatpush2.msra.mxu0 0.0
    %600 = vmatprep.subr.mxu0 0.0
    %601 = vmatpush2.msra.mxu0 0.0
    %602 = vmatprep.subr.mxu0 0.0
    %603 = vmatpush2.msra.mxu0 0.0
    %604 = vmatprep.subr.mxu0 0.0
    %605 = vmatpush2.msra.mxu0 0.0
    %606 = vmatprep.subr.mxu0 0.0
    %607 = vmatpush2.msra.mxu0 0.0
    %608 = vmatprep.mubr.f32.mxu0 0.0
    %609 = vmatmul.mubr.f32.gmra.mxu0 %v542
    %v610 = vpop.f32.mrf.mxu0
    %v611 = vadd.f32 0.0, %v610
    %v612 = vpop.f32.mrf.mxu0
    %613 = vdwg.mxu0
    %v615 = vrot.slane %v611, 4
    %v617 = vadd.f32 %v108, %v615
    %v618 = vxor.u32 %v617, 2147483648
    %v619 = vmul.f32 %v618, 1.442695
    %v620 = vpow.pop %v619
    %v621 = vadd.f32 %v620, 1.0
    %v622 = vrcp.pop %v621
    %v623 = vmul.f32 1.0, %v622
    %v624 = vmul.f32 %v623, 2.0
    %v625 = vsub.f32 %v624, 1.0
    %v627 = vrot.slane %v531, 7
    %v629 = vmul.f32 %v623, %v627
    %631 = vrot.lane.b32.xlu0 %v625, 64
    %v632 = vpop.permute.xlu0 %631
    %v634 = vmul.f32 %v623, %v632
    %636 = vrot.lane.b32.xlu0 %v634, 32
    %v637 = vpop.permute.xlu0 %636
    %v639 = vadd.f32 %v629, %v637
    %v640 = vtanh.pop %v639
    %642 = vrot.lane.b32.xlu0 %v640, 64
    %v643 = vpop.permute.xlu0 %642
    %v645 = vmul.f32 %v623, %v643
    %v647 = vrot.slane %v645, 4
    %648 = vrot.lane.b32.xlu0 %v647, 32
    %v649 = vpop.permute.xlu0 %648
    %v650 = vsel %vm115, %v649, 0
    %652 = vmatprep.subr.mxu0 0.0
    %653 = vmatpush1.msra.mxu0 0.0
    %654 = vmatprep.subr.mxu0 0.0
    %655 = vmatpush1.msra.mxu0 0.0
    %656 = vmatprep.subr.mxu0 0.0
    %657 = vmatpush1.msra.mxu0 0.0
    %658 = vmatprep.subr.mxu0 0.0
    %659 = vmatpush1.msra.mxu0 0.0
    %660 = vmatprep.subr.mxu0 0.0
    %661 = vmatpush1.msra.mxu0 0.0
    %662 = vmatprep.subr.mxu0 0.0
    %663 = vmatpush1.msra.mxu0 0.0
    %664 = vmatprep.subr.mxu0 0.0
    %665 = vmatpush1.msra.mxu0 0.0
    %666 = vmatprep.subr.mxu0 0.0
    %667 = vmatpush1.msra.mxu0 0.0
    %668 = vmatprep.subr.mxu0 0.0
    %669 = vmatpush1.msra.mxu0 0.0
    %670 = vmatprep.subr.mxu0 0.0
    %671 = vmatpush1.msra.mxu0 0.0
    %672 = vmatprep.subr.mxu0 0.0
    %673 = vmatpush1.msra.mxu0 0.0
    %674 = vmatprep.subr.mxu0 0.0
    %675 = vmatpush1.msra.mxu0 0.0
    %676 = vmatprep.subr.mxu0 0.0
    %677 = vmatpush1.msra.mxu0 %v114
    %678 = vmatprep.subr.mxu0 0.0
    %679 = vmatpush1.msra.mxu0 %v113
    %680 = vmatprep.subr.mxu0 0.0
    %681 = vmatpush1.msra.mxu0 %v112
    %682 = vmatprep.subr.mxu0 0.0
    %683 = vmatpush1.msra.mxu0 %v111
    %684 = vmatprep.subr.mxu0 0.0
    %685 = vmatpush2.msra.mxu0 0.0
    %686 = vmatprep.subr.mxu0 0.0
    %687 = vmatpush2.msra.mxu0 0.0
    %688 = vmatprep.subr.mxu0 0.0
    %689 = vmatpush2.msra.mxu0 0.0
    %690 = vmatprep.subr.mxu0 0.0
    %691 = vmatpush2.msra.mxu0 0.0
    %692 = vmatprep.subr.mxu0 0.0
    %693 = vmatpush2.msra.mxu0 0.0
    %694 = vmatprep.subr.mxu0 0.0
    %695 = vmatpush2.msra.mxu0 0.0
    %696 = vmatprep.subr.mxu0 0.0
    %697 = vmatpush2.msra.mxu0 0.0
    %698 = vmatprep.subr.mxu0 0.0
    %699 = vmatpush2.msra.mxu0 0.0
    %700 = vmatprep.subr.mxu0 0.0
    %701 = vmatpush2.msra.mxu0 0.0
    %702 = vmatprep.subr.mxu0 0.0
    %703 = vmatpush2.msra.mxu0 0.0
    %704 = vmatprep.subr.mxu0 0.0
    %705 = vmatpush2.msra.mxu0 0.0
    %706 = vmatprep.subr.mxu0 0.0
    %707 = vmatpush2.msra.mxu0 0.0
    %708 = vmatprep.subr.mxu0 0.0
    %709 = vmatpush2.msra.mxu0 0.0
    %710 = vmatprep.subr.mxu0 0.0
    %711 = vmatpush2.msra.mxu0 0.0
    %712 = vmatprep.subr.mxu0 0.0
    %713 = vmatpush2.msra.mxu0 0.0
    %714 = vmatprep.subr.mxu0 0.0
    %715 = vmatpush2.msra.mxu0 0.0
    %716 = vmatprep.mubr.f32.mxu0 0.0
    %717 = vmatmul.mubr.f32.gmra.mxu0 %v650
    %v718 = vpop.f32.mrf.mxu0
    %v719 = vadd.f32 0.0, %v718
    %v720 = vpop.f32.mrf.mxu0
    %721 = vdwg.mxu0
    %v723 = vrot.slane %v719, 3
    %v725 = vadd.f32 %v108, %v723
    %v726 = vxor.u32 %v725, 2147483648
    %v727 = vmul.f32 %v726, 1.442695
    %v728 = vpow.pop %v727
    %v729 = vadd.f32 %v728, 1.0
    %v730 = vrcp.pop %v729
    %v731 = vmul.f32 1.0, %v730
    %v732 = vmul.f32 %v731, 2.0
    %v733 = vsub.f32 %v732, 1.0
    %v735 = vrot.slane %v639, 7
    %v737 = vmul.f32 %v731, %v735
    %739 = vrot.lane.b32.xlu0 %v733, 64
    %v740 = vpop.permute.xlu0 %739
    %v742 = vmul.f32 %v731, %v740
    %744 = vrot.lane.b32.xlu0 %v742, 32
    %v745 = vpop.permute.xlu0 %744
    %v747 = vadd.f32 %v737, %v745
    %v748 = vtanh.pop %v747
    %750 = vrot.lane.b32.xlu0 %v748, 64
    %v751 = vpop.permute.xlu0 %750
    %v753 = vmul.f32 %v731, %v751
    %v755 = vrot.slane %v753, 5
    %756 = vrot.lane.b32.xlu0 %v755, 32
    %v757 = vpop.permute.xlu0 %756
    %v758 = vsel %vm115, %v757, 0
    %760 = vmatprep.subr.mxu0 0.0
    %761 = vmatpush1.msra.mxu0 0.0
    %762 = vmatprep.subr.mxu0 0.0
    %763 = vmatpush1.msra.mxu0 0.0
    %764 = vmatprep.subr.mxu0 0.0
    %765 = vmatpush1.msra.mxu0 0.0
    %766 = vmatprep.subr.mxu0 0.0
    %767 = vmatpush1.msra.mxu0 0.0
    %768 = vmatprep.subr.mxu0 0.0
    %769 = vmatpush1.msra.mxu0 0.0
    %770 = vmatprep.subr.mxu0 0.0
    %771 = vmatpush1.msra.mxu0 0.0
    %772 = vmatprep.subr.mxu0 0.0
    %773 = vmatpush1.msra.mxu0 0.0
    %774 = vmatprep.subr.mxu0 0.0
    %775 = vmatpush1.msra.mxu0 0.0
    %776 = vmatprep.subr.mxu0 0.0
    %777 = vmatpush1.msra.mxu0 0.0
    %778 = vmatprep.subr.mxu0 0.0
    %779 = vmatpush1.msra.mxu0 0.0
    %780 = vmatprep.subr.mxu0 0.0
    %781 = vmatpush1.msra.mxu0 0.0
    %782 = vmatprep.subr.mxu0 0.0
    %783 = vmatpush1.msra.mxu0 0.0
    %784 = vmatprep.subr.mxu0 0.0
    %785 = vmatpush1.msra.mxu0 %v114
    %786 = vmatprep.subr.mxu0 0.0
    %787 = vmatpush1.msra.mxu0 %v113
    %788 = vmatprep.subr.mxu0 0.0
    %789 = vmatpush1.msra.mxu0 %v112
    %790 = vmatprep.subr.mxu0 0.0
    %791 = vmatpush1.msra.mxu0 %v111
    %792 = vmatprep.subr.mxu0 0.0
    %793 = vmatpush2.msra.mxu0 0.0
    %794 = vmatprep.subr.mxu0 0.0
    %795 = vmatpush2.msra.mxu0 0.0
    %796 = vmatprep.subr.mxu0 0.0
    %797 = vmatpush2.msra.mxu0 0.0
    %798 = vmatprep.subr.mxu0 0.0
    %799 = vmatpush2.msra.mxu0 0.0
    %800 = vmatprep.subr.mxu0 0.0
    %801 = vmatpush2.msra.mxu0 0.0
    %802 = vmatprep.subr.mxu0 0.0
    %803 = vmatpush2.msra.mxu0 0.0
    %804 = vmatprep.subr.mxu0 0.0
    %805 = vmatpush2.msra.mxu0 0.0
    %806 = vmatprep.subr.mxu0 0.0
    %807 = vmatpush2.msra.mxu0 0.0
    %808 = vmatprep.subr.mxu0 0.0
    %809 = vmatpush2.msra.mxu0 0.0
    %810 = vmatprep.subr.mxu0 0.0
    %811 = vmatpush2.msra.mxu0 0.0
    %812 = vmatprep.subr.mxu0 0.0
    %813 = vmatpush2.msra.mxu0 0.0
    %814 = vmatprep.subr.mxu0 0.0
    %815 = vmatpush2.msra.mxu0 0.0
    %816 = vmatprep.subr.mxu0 0.0
    %817 = vmatpush2.msra.mxu0 0.0
    %818 = vmatprep.subr.mxu0 0.0
    %819 = vmatpush2.msra.mxu0 0.0
    %820 = vmatprep.subr.mxu0 0.0
    %821 = vmatpush2.msra.mxu0 0.0
    %822 = vmatprep.subr.mxu0 0.0
    %823 = vmatpush2.msra.mxu0 0.0
    %824 = vmatprep.mubr.f32.mxu0 0.0
    %825 = vmatmul.mubr.f32.gmra.mxu0 %v758
    %v826 = vpop.f32.mrf.mxu0
    %v827 = vadd.f32 0.0, %v826
    %v828 = vpop.f32.mrf.mxu0
    %829 = vdwg.mxu0
    %v831 = vrot.slane %v827, 2
    %v833 = vadd.f32 %v108, %v831
    %v834 = vxor.u32 %v833, 2147483648
    %v835 = vmul.f32 %v834, 1.442695
    %v836 = vpow.pop %v835
    %v837 = vadd.f32 %v836, 1.0
    %v838 = vrcp.pop %v837
    %v839 = vmul.f32 1.0, %v838
    %v840 = vmul.f32 %v839, 2.0
    %v841 = vsub.f32 %v840, 1.0
    %v843 = vrot.slane %v747, 7
    %v845 = vmul.f32 %v839, %v843
    %847 = vrot.lane.b32.xlu0 %v841, 64
    %v848 = vpop.permute.xlu0 %847
    %v850 = vmul.f32 %v839, %v848
    %852 = vrot.lane.b32.xlu0 %v850, 32
    %v853 = vpop.permute.xlu0 %852
    %v855 = vadd.f32 %v845, %v853
    %v856 = vtanh.pop %v855
    %858 = vrot.lane.b32.xlu0 %v856, 64
    %v859 = vpop.permute.xlu0 %858
    %v861 = vmul.f32 %v839, %v859
    %v863 = vrot.slane %v861, 6
    %864 = vrot.lane.b32.xlu0 %v863, 32
    %v865 = vpop.permute.xlu0 %864
    %v866 = vsel %vm115, %v865, 0
    %868 = vmatprep.subr.mxu0 0.0
    %869 = vmatpush1.msra.mxu0 0.0
    %870 = vmatprep.subr.mxu0 0.0
    %871 = vmatpush1.msra.mxu0 0.0
    %872 = vmatprep.subr.mxu0 0.0
    %873 = vmatpush1.msra.mxu0 0.0
    %874 = vmatprep.subr.mxu0 0.0
    %875 = vmatpush1.msra.mxu0 0.0
    %876 = vmatprep.subr.mxu0 0.0
    %877 = vmatpush1.msra.mxu0 0.0
    %878 = vmatprep.subr.mxu0 0.0
    %879 = vmatpush1.msra.mxu0 0.0
    %880 = vmatprep.subr.mxu0 0.0
    %881 = vmatpush1.msra.mxu0 0.0
    %882 = vmatprep.subr.mxu0 0.0
    %883 = vmatpush1.msra.mxu0 0.0
    %884 = vmatprep.subr.mxu0 0.0
    %885 = vmatpush1.msra.mxu0 0.0
    %886 = vmatprep.subr.mxu0 0.0
    %887 = vmatpush1.msra.mxu0 0.0
    %888 = vmatprep.subr.mxu0 0.0
    %889 = vmatpush1.msra.mxu0 0.0
    %890 = vmatprep.subr.mxu0 0.0
    %891 = vmatpush1.msra.mxu0 0.0
    %892 = vmatprep.subr.mxu0 0.0
    %893 = vmatpush1.msra.mxu0 %v114
    %894 = vmatprep.subr.mxu0 0.0
    %895 = vmatpush1.msra.mxu0 %v113
    %896 = vmatprep.subr.mxu0 0.0
    %897 = vmatpush1.msra.mxu0 %v112
    %898 = vmatprep.subr.mxu0 0.0
    %899 = vmatpush1.msra.mxu0 %v111
    %900 = vmatprep.subr.mxu0 0.0
    %901 = vmatpush2.msra.mxu0 0.0
    %902 = vmatprep.subr.mxu0 0.0
    %903 = vmatpush2.msra.mxu0 0.0
    %904 = vmatprep.subr.mxu0 0.0
    %905 = vmatpush2.msra.mxu0 0.0
    %906 = vmatprep.subr.mxu0 0.0
    %907 = vmatpush2.msra.mxu0 0.0
    %908 = vmatprep.subr.mxu0 0.0
    %909 = vmatpush2.msra.mxu0 0.0
    %910 = vmatprep.subr.mxu0 0.0
    %911 = vmatpush2.msra.mxu0 0.0
    %912 = vmatprep.subr.mxu0 0.0
    %913 = vmatpush2.msra.mxu0 0.0
    %914 = vmatprep.subr.mxu0 0.0
    %915 = vmatpush2.msra.mxu0 0.0
    %916 = vmatprep.subr.mxu0 0.0
    %917 = vmatpush2.msra.mxu0 0.0
    %918 = vmatprep.subr.mxu0 0.0
    %919 = vmatpush2.msra.mxu0 0.0
    %920 = vmatprep.subr.mxu0 0.0
    %921 = vmatpush2.msra.mxu0 0.0
    %922 = vmatprep.subr.mxu0 0.0
    %923 = vmatpush2.msra.mxu0 0.0
    %924 = vmatprep.subr.mxu0 0.0
    %925 = vmatpush2.msra.mxu0 0.0
    %926 = vmatprep.subr.mxu0 0.0
    %927 = vmatpush2.msra.mxu0 0.0
    %928 = vmatprep.subr.mxu0 0.0
    %929 = vmatpush2.msra.mxu0 0.0
    %930 = vmatprep.subr.mxu0 0.0
    %931 = vmatpush2.msra.mxu0 0.0
    %932 = vmatprep.mubr.f32.mxu0 0.0
    %933 = vmatmul.mubr.f32.gmra.mxu0 %v866
    %v934 = vpop.f32.mrf.mxu0
    %v935 = vadd.f32 0.0, %v934
    %v936 = vpop.f32.mrf.mxu0
    %937 = vdwg.mxu0
    %v939 = vrot.slane %v935, 1
    %v941 = vadd.f32 %v108, %v939
    %v942 = vxor.u32 %v941, 2147483648
    %v943 = vmul.f32 %v942, 1.442695
    %v944 = vpow.pop %v943
    %v945 = vadd.f32 %v944, 1.0
    %v946 = vrcp.pop %v945
    %v947 = vmul.f32 1.0, %v946
    %v948 = vmul.f32 %v947, 2.0
    %v949 = vsub.f32 %v948, 1.0
    %v951 = vrot.slane %v855, 7
    %v953 = vmul.f32 %v947, %v951
    %955 = vrot.lane.b32.xlu0 %v949, 64
    %v956 = vpop.permute.xlu0 %955
    %v958 = vmul.f32 %v947, %v956
    %960 = vrot.lane.b32.xlu0 %v958, 32
    %v961 = vpop.permute.xlu0 %960
    %v963 = vadd.f32 %v953, %v961
    %v964 = vtanh.pop %v963
    %966 = vrot.lane.b32.xlu0 %v964, 64
    %v967 = vpop.permute.xlu0 %966
    %v969 = vmul.f32 %v947, %v967
    %v970 = vld [vmem:[%s4] sm:$0xff]
    %v971 = vld [vmem:[%s4 + $0x8] sm:$0xff]
    %v972 = vld [vmem:[%s4 + $0x10] sm:$0xff]
    %v973 = vld [vmem:[%s4 + $0x18] sm:$0xff]
    %v974 = vld [vmem:[%s5] sm:$0x1]
    %v976 = vrot.slane %v969, 7
    %977 = vrot.lane.b32.xlu0 %v976, 32
    %v978 = vpop.permute.xlu0 %977
    %v979 = vsel %vm115, %v978, 0
    %981 = vmatprep.subr.mxu0 0.0
    %982 = vmatpush1.msra.mxu0 0.0
    %983 = vmatprep.subr.mxu0 0.0
    %984 = vmatpush1.msra.mxu0 0.0
    %985 = vmatprep.subr.mxu0 0.0
    %986 = vmatpush1.msra.mxu0 0.0
    %987 = vmatprep.subr.mxu0 0.0
    %988 = vmatpush1.msra.mxu0 0.0
    %989 = vmatprep.subr.mxu0 0.0
    %990 = vmatpush1.msra.mxu0 0.0
    %991 = vmatprep.subr.mxu0 0.0
    %992 = vmatpush1.msra.mxu0 0.0
    %993 = vmatprep.subr.mxu0 0.0
    %994 = vmatpush1.msra.mxu0 0.0
    %995 = vmatprep.subr.mxu0 0.0
    %996 = vmatpush1.msra.mxu0 0.0
    %997 = vmatprep.subr.mxu0 0.0
    %998 = vmatpush1.msra.mxu0 0.0
    %999 = vmatprep.subr.mxu0 0.0
    %1000 = vmatpush1.msra.mxu0 0.0
    %1001 = vmatprep.subr.mxu0 0.0
    %1002 = vmatpush1.msra.mxu0 0.0
    %1003 = vmatprep.subr.mxu0 0.0
    %1004 = vmatpush1.msra.mxu0 0.0
    %1005 = vmatprep.subr.mxu0 0.0
    %1006 = vmatpush1.msra.mxu0 %v973
    %1007 = vmatprep.subr.mxu0 0.0
    %1008 = vmatpush1.msra.mxu0 %v972
    %1009 = vmatprep.subr.mxu0 0.0
    %1010 = vmatpush1.msra.mxu0 %v971
    %1011 = vmatprep.subr.mxu0 0.0
    %1012 = vmatpush1.msra.mxu0 %v970
    %1013 = vmatprep.subr.mxu0 0.0
    %1014 = vmatpush2.msra.mxu0 0.0
    %1015 = vmatprep.subr.mxu0 0.0
    %1016 = vmatpush2.msra.mxu0 0.0
    %1017 = vmatprep.subr.mxu0 0.0
    %1018 = vmatpush2.msra.mxu0 0.0
    %1019 = vmatprep.subr.mxu0 0.0
    %1020 = vmatpush2.msra.mxu0 0.0
    %1021 = vmatprep.subr.mxu0 0.0
    %1022 = vmatpush2.msra.mxu0 0.0
    %1023 = vmatprep.subr.mxu0 0.0
    %1024 = vmatpush2.msra.mxu0 0.0
    %1025 = vmatprep.subr.mxu0 0.0
    %1026 = vmatpush2.msra.mxu0 0.0
    %1027 = vmatprep.subr.mxu0 0.0
    %1028 = vmatpush2.msra.mxu0 0.0
    %1029 = vmatprep.subr.mxu0 0.0
    %1030 = vmatpush2.msra.mxu0 0.0
    %1031 = vmatprep.subr.mxu0 0.0
    %1032 = vmatpush2.msra.mxu0 0.0
    %1033 = vmatprep.subr.mxu0 0.0
    %1034 = vmatpush2.msra.mxu0 0.0
    %1035 = vmatprep.subr.mxu0 0.0
    %1036 = vmatpush2.msra.mxu0 0.0
    %1037 = vmatprep.subr.mxu0 0.0
    %1038 = vmatpush2.msra.mxu0 0.0
    %1039 = vmatprep.subr.mxu0 0.0
    %1040 = vmatpush2.msra.mxu0 0.0
    %1041 = vmatprep.subr.mxu0 0.0
    %1042 = vmatpush2.msra.mxu0 0.0
    %1043 = vmatprep.subr.mxu0 0.0
    %1044 = vmatpush2.msra.mxu0 0.0
    %1045 = vmatprep.mubr.f32.mxu0 0.0
    %1046 = vmatmul.mubr.f32.gmra.mxu0 %v979
    %v1047 = vpop.f32.mrf.mxu0
    %v1048 = vadd.f32 %v974, %v1047
    %v1049 = vpop.f32.mrf.mxu0
    %1050 = vdwg.mxu0
    %vm1051 = vcmask 24576
    %1052 = vst.msk [vmem:[#allocation2] sm:$0x1] %vm1051, %v1048
    // Predicated region
    $region26: #{tpu_custom_call.1} parent=1 // pred_check
      _
    $region27: #{tpu_custom_call.1} parent=1 // pred_check_branch
      %1054 = sbr.rel (0) target = $region29
    $region28: #{tpu_custom_call.1} parent=1 // pred_region
      %s1056 = ssub.s32 16, 16
      %1057 = vsyncadd [#allocation3], %s1056
      %s1059 = sshll.u32 [#allocation2], 4
      %s1060 = int_to_ptr.vmem [resolvable:$true] %s1059
      %1062 = dma.vmem_to_hbm [thread:$0]  %s1060, 16, %s6, [#allocation3]
    $region29: #{tpu_custom_call.1} parent=1 // pred_fallthru
      _
    // Predicated region
    $region30: #{tpu_custom_call.1} parent=1 // pred_check
      _
    $region31: #{tpu_custom_call.1} parent=1 // pred_check_branch
      %1064 = sbr.rel (0) target = $region33
    $region32: #{tpu_custom_call.1} parent=1 // pred_region
      %1065 = dma.done [#allocation3], 16
    $region33: #{tpu_custom_call.1} parent=1 // pred_fallthru
      _
    %1066 = vsyncpa [#allocation3], 1

</llo_original>
